<compile_context>
chip_gen: v5e
topology: v5e:2x2
jax: 0.10.0
libtpu: 0.0.40
codegen_flags: <defaults>
</compile_context>

<pallas_src>
import functools

import jax
import jax.numpy as jnp
from jax import lax
from jax.experimental import pallas as pl
from jax.experimental.pallas import tpu as pltpu


# ----------------------------------------------------------------------------
# small helpers
# ----------------------------------------------------------------------------
def _round_up(n: int, m: int) -> int:
    return ((n + m - 1) // m) * m


def _pad_axis(a, axis, target):
    pad = target - a.shape[axis]
    if pad == 0:
        return a
    widths = [(0, 0)] * a.ndim
    widths[axis] = (0, pad)
    return jnp.pad(a, widths)


def _pick_token_tile(t_pad: int) -> int:
    for cand in (256, 128, 64, 32, 16, 8):
        if t_pad % cand == 0:
            return cand
    return t_pad


# ----------------------------------------------------------------------------
# Pallas kernel. Grid = (token tiles [parallel], experts [arbitrary]).
# Expert 0 is the shared FFN with routing weight 1.0 for every token.
# ----------------------------------------------------------------------------
def _moe_kernel(fetch_ref, x_ref, p_ref, w1_ref, w3_ref, w2_ref, out_ref):
    t = pl.program_id(0)            # token-tile index ("parallel")
    e = pl.program_id(1)            # expert index     ("arbitrary" reduction)
    n_e = pl.num_programs(1)

    @pl.when(e == 0)
    def _init():
        out_ref[...] = jnp.zeros_like(out_ref)

    # fetch_ref[t * n_e + e] == e  <=>  some token in this tile is routed to
    # expert e (expert 0 = shared FFN, always active). When false, the whole
    # step is skipped and the weight index_map already re-used the previously
    # fetched block, so no weight DMA was issued either.
    @pl.when(fetch_ref[t * n_e + e] == e)
    def _ffn():
        x = x_ref[...]                                                    # (tT, Dp) bf16
        x1 = jnp.dot(x, w1_ref[...], preferred_element_type=jnp.float32)  # (tT, Ip) f32
        x3 = jnp.dot(x, w3_ref[...], preferred_element_type=jnp.float32)  # (tT, Ip) f32
        h = (jax.nn.silu(x1) * x3).astype(w2_ref.dtype)                   # f32 silu -> bf16
        d = jnp.dot(h, w2_ref[...], preferred_element_type=jnp.float32)   # (tT, Dp) f32
        out_ref[...] += p_ref[...] * d                                    # (tT,1)*(tT,Dp)


# ----------------------------------------------------------------------------
# Full MOEFeedForward forward pass. Gating (tiny matmul + top-k + scatter) is
# plain-JAX glue; the expert + shared FFN hot path runs in the kernel.
# ----------------------------------------------------------------------------
@functools.partial(jax.jit, static_argnames=("topk",))
def moe_feed_forward(x, wg, w1, w2, w3, ws1, ws2, ws3, *, topk):
    E, D = wg.shape
    I = w1.shape[1]
    Is = ws1.shape[0]
    x2d = x.reshape(-1, D).astype(jnp.float32)                # (T, D)
    T = x2d.shape[0]

    # ---- gating: logits -> top-k -> softmax -> dense probs / routing map ----
    logits = x2d @ wg.T                                       # (T, E)
    top_vals, top_idx = lax.top_k(logits, topk)
    top_w = jax.nn.softmax(top_vals, axis=-1)
    rows = jnp.arange(T)[:, None]
    probs = jnp.zeros_like(logits).at[rows, top_idx].set(top_w)               # (T, E)
    routing = jnp.zeros_like(logits, dtype=jnp.bool_).at[rows, top_idx].set(True)

    # ---- lane/sublane-dense padded sizes ----
    d_pad = _round_up(D, 128)
    i_pad = _round_up(max(I, Is), 128)
    t_pad = _round_up(T, 8)
    t_tile = _pick_token_tile(t_pad)
    n_t = t_pad // t_tile
    n_e = E + 1                                               # expert 0 == shared FFN

    # ---- pre-transpose weights to [in, out], fold shared FFN in as expert 0,
    #      zero-pad to lane-dense shapes, cast to bf16 (done once outside the
    #      kernel; a real model would cache this packing) ----
    def pack_up(shared, experts):                             # -> (nE, Dp, Ip) bf16
        sh = _pad_axis(_pad_axis(shared.T, 0, d_pad), 1, i_pad)
        ex = _pad_axis(_pad_axis(jnp.swapaxes(experts, 1, 2), 1, d_pad), 2, i_pad)
        return jnp.concatenate([sh[None], ex], axis=0).astype(jnp.bfloat16)

    w13g = pack_up(ws1, w1)                                   # gate proj (silu branch)
    w13u = pack_up(ws3, w3)                                   # up proj
    sh2 = _pad_axis(_pad_axis(ws2.T, 0, i_pad), 1, d_pad)
    ex2 = _pad_axis(_pad_axis(jnp.swapaxes(w2, 1, 2), 1, i_pad), 2, d_pad)
    w2t = jnp.concatenate([sh2[None], ex2], axis=0).astype(jnp.bfloat16)   # (nE, Ip, Dp)

    # ---- padded activations / per-expert routing probs ----
    x_pad = _pad_axis(_pad_axis(x2d, 0, t_pad), 1, d_pad).astype(jnp.bfloat16)   # (Tp, Dp)
    probs_pad = _pad_axis(probs, 0, t_pad)                                       # (Tp, E)
    probs_aug = jnp.concatenate(
        [jnp.ones((1, t_pad, 1), jnp.float32),                # shared expert: weight 1.0
         probs_pad.T[:, :, None]], axis=0)                    # (nE, Tp, 1)

    # ---- scalar-prefetch fetch table: fetch[t, e] = e if a token in tile t is
    #      routed to expert e, else the last active expert index (<= e) so that
    #      the weight index_map repeats the previous block (DMA skipped). ----
    mask_te = _pad_axis(routing, 0, t_pad).reshape(n_t, t_tile, E).any(axis=1)    # (nT, E)
    mask_aug = jnp.concatenate([jnp.ones((n_t, 1), jnp.bool_), mask_te], axis=1)  # (nT, nE)
    cand = jnp.where(mask_aug, jnp.arange(n_e, dtype=jnp.int32)[None, :], -1)
    fetch = lax.cummax(cand, axis=1).reshape(-1).astype(jnp.int32)                # (nT*nE,)

    # ---- explicit VMEM budget: double-buffered bf16 weight blocks + resident
    #      x/out tiles + f32 intermediates, with generous headroom ----
    # TODO(synk): if a single expert's (Dp x Ip) blocks exceed the v7x 64 MiB
    # budget, add an inner grid axis that tiles the intermediate dimension.
    w_bytes = 2 * (2 * d_pad * i_pad + i_pad * d_pad) * 2
    act_bytes = t_tile * d_pad * (2 * 2 + 4) + 3 * t_tile * i_pad * 4 + 2 * t_tile * 4
    vmem_limit = int(min(max(2 * (w_bytes + act_bytes) + (2 << 20), 8 << 20), 48 << 20))

    out_pad = pl.pallas_call(
        _moe_kernel,
        out_shape=jax.ShapeDtypeStruct((t_pad, d_pad), jnp.float32),
        grid_spec=pltpu.PrefetchScalarGridSpec(
            num_scalar_prefetch=1,
            grid=(n_t, n_e),
            in_specs=[
                pl.BlockSpec((t_tile, d_pad), lambda t, e, f: (t, 0)),                 # x
                pl.BlockSpec((pl.Squeezed(), t_tile, 1), lambda t, e, f: (e, t, 0)),   # probs
                pl.BlockSpec((pl.Squeezed(), d_pad, i_pad),
                             lambda t, e, f: (f[t * n_e + e], 0, 0)),                  # w1
                pl.BlockSpec((pl.Squeezed(), d_pad, i_pad),
                             lambda t, e, f: (f[t * n_e + e], 0, 0)),                  # w3
                pl.BlockSpec((pl.Squeezed(), i_pad, d_pad),
                             lambda t, e, f: (f[t * n_e + e], 0, 0)),                  # w2
            ],
            out_specs=pl.BlockSpec((t_tile, d_pad), lambda t, e, f: (t, 0)),
        ),
        compiler_params=pltpu.CompilerParams(
            dimension_semantics=("parallel", "arbitrary"),
            vmem_limit_bytes=vmem_limit),
    )(fetch, x_pad, probs_aug, w13g, w13u, w2t)

    return out_pad[:T, :D]


# ----------------------------------------------------------------------------
# Pure-JAX f32 reference (same masked-dense math as the torch module).
# ----------------------------------------------------------------------------
def moe_reference(x, wg, w1, w2, w3, ws1, ws2, ws3, *, topk):
    D = wg.shape[1]
    x2d = x.reshape(-1, D)
    T = x2d.shape[0]
    logits = x2d @ wg.T
    top_vals, top_idx = lax.top_k(logits, topk)
    top_w = jax.nn.softmax(top_vals, axis=-1)
    probs = jnp.zeros_like(logits).at[jnp.arange(T)[:, None], top_idx].set(top_w)

    expert_out = jnp.zeros_like(x2d)
    for e in range(w1.shape[0]):
        h = jax.nn.silu(x2d @ w1[e].T) * (x2d @ w3[e].T)
        expert_out = expert_out + probs[:, e:e + 1] * (h @ w2[e].T)
    shared = (jax.nn.silu(x2d @ ws1.T) * (x2d @ ws3.T)) @ ws2.T
    return expert_out + shared


if __name__ == "__main__":
    # ModelArgs defaults
    dim = 16
    intermediate_size = 64
    num_experts = 8
    router_topk = 2
    num_shared_experts = 1
    shared_inter = intermediate_size * num_shared_experts

    batch, seq = 2, 8                                         # T = 16 tokens

    key = jax.random.PRNGKey(0)
    keys = jax.random.split(key, 9)
    scale = 0.05
    x = jax.random.normal(keys[0], (batch, seq, dim), jnp.float32)
    wg = scale * jax.random.normal(keys[1], (num_experts, dim), jnp.float32)
    w1 = scale * jax.random.normal(keys[2], (num_experts, intermediate_size, dim), jnp.float32)
    w2 = scale * jax.random.normal(keys[3], (num_experts, dim, intermediate_size), jnp.float32)
    w3 = scale * jax.random.normal(keys[4], (num_experts, intermediate_size, dim), jnp.float32)
    ws1 = scale * jax.random.normal(keys[5], (shared_inter, dim), jnp.float32)
    ws2 = scale * jax.random.normal(keys[6], (dim, shared_inter), jnp.float32)
    ws3 = scale * jax.random.normal(keys[7], (shared_inter, dim), jnp.float32)

    out = moe_feed_forward(x, wg, w1, w2, w3, ws1, ws2, ws3, topk=router_topk)
    out = jax.block_until_ready(out)

    ref = moe_reference(x, wg, w1, w2, w3, ws1, ws2, ws3, topk=router_topk)
    assert out.shape == (batch * seq, dim)
    assert jnp.allclose(out, ref, rtol=2e-2, atol=2e-2), "mismatch vs JAX reference"

    print("KERNEL_OK")
</pallas_src>

<mosaic_0001>
module attributes {stable_mosaic.version = 11 : i64} {
  func.func @_moe_kernel(%arg0: i32, %arg1: i32, %arg2: memref<9xi32, #tpu.memory_space<smem>>, %arg3: memref<16x128xbf16, #tpu.memory_space<vmem>>, %arg4: memref<1x16x1xf32, #tpu.memory_space<vmem>>, %arg5: memref<1x128x128xbf16, #tpu.memory_space<vmem>>, %arg6: memref<1x128x128xbf16, #tpu.memory_space<vmem>>, %arg7: memref<1x128x128xbf16, #tpu.memory_space<vmem>>, %arg8: memref<16x128xf32, #tpu.memory_space<vmem>>) attributes {dimension_semantics = [#tpu.dimension_semantics<parallel>, #tpu.dimension_semantics<arbitrary>], iteration_bounds = array<i64: 1, 9>, scalar_prefetch = 1 : i64, scratch_operands = 0 : i64, tpu.core_type = #tpu.core_type<tc>, window_params = [{transform_indices = @transform_0, window_bounds = array<i64: 16, 128>}, {transform_indices = @transform_1, window_bounds = array<i64: 1, 16, 1>}, {transform_indices = @transform_2, window_bounds = array<i64: 1, 128, 128>}, {transform_indices = @transform_3, window_bounds = array<i64: 1, 128, 128>}, {transform_indices = @transform_4, window_bounds = array<i64: 1, 128, 128>}, {transform_indices = @transform_5, window_bounds = array<i64: 16, 128>}]} {
    %c0_i32 = arith.constant 0 : i32
    %0 = arith.cmpi eq, %arg1, %c0_i32 : i32
    %1 = arith.extui %0 : i1 to i32
    %c0_i32_0 = arith.constant 0 : i32
    %2 = arith.cmpi ne, %1, %c0_i32_0 : i32
    scf.if %2 {
      %cst = arith.constant 0.000000e+00 : f32
      %10 = vector.broadcast %cst : f32 to vector<16x128xf32>
      %c0 = arith.constant 0 : index
      %c0_2 = arith.constant 0 : index
      %11 = vector.load %arg8[%c0, %c0_2] : memref<16x128xf32, #tpu.memory_space<vmem>>, vector<16x128xf32>
      tpu.vector_store %arg8[%c0, %c0_2], %10 {strides = array<i32>} : memref<16x128xf32, #tpu.memory_space<vmem>>, vector<16x128xf32>,
    } else {
    }
    %c9_i32 = arith.constant 9 : i32
    %3 = arith.muli %arg0, %c9_i32 : i32
    %4 = arith.addi %3, %arg1 : i32
    %5 = arith.index_cast %4 : i32 to index
    %6 = memref.load %arg2[%5] : memref<9xi32, #tpu.memory_space<smem>>
    %7 = arith.cmpi eq, %6, %arg1 : i32
    %8 = arith.extui %7 : i1 to i32
    %c0_i32_1 = arith.constant 0 : i32
    %9 = arith.cmpi ne, %8, %c0_i32_1 : i32
    scf.if %9 {
      %c0 = arith.constant 0 : index
      %c0_2 = arith.constant 0 : index
      %10 = vector.load %arg3[%c0, %c0_2] : memref<16x128xbf16, #tpu.memory_space<vmem>>, vector<16x128xbf16>
      %c0_3 = arith.constant 0 : index
      %c0_4 = arith.constant 0 : index
      %c0_5 = arith.constant 0 : index
      %11 = vector.load %arg5[%c0_3, %c0_4, %c0_5] : memref<1x128x128xbf16, #tpu.memory_space<vmem>>, vector<1x128x128xbf16>
      %12 = vector.shape_cast %11 : vector<1x128x128xbf16> to vector<128x128xbf16>
      %cst = arith.constant dense<0.000000e+00> : vector<16x128xf32>
      %13 = tpu.matmul %10, %12, %cst {dimension_numbers = #tpu.dot_dimension_numbers<[1], [0], [0], [1], [0, 0, 1, 1], [], []>} : vector<16x128xbf16>, vector<128x128xbf16>, vector<16x128xf32> -> vector<16x128xf32>
      %c0_6 = arith.constant 0 : index
      %c0_7 = arith.constant 0 : index
      %c0_8 = arith.constant 0 : index
      %14 = vector.load %arg6[%c0_6, %c0_7, %c0_8] : memref<1x128x128xbf16, #tpu.memory_space<vmem>>, vector<1x128x128xbf16>
      %15 = vector.shape_cast %14 : vector<1x128x128xbf16> to vector<128x128xbf16>
      %cst_9 = arith.constant dense<0.000000e+00> : vector<16x128xf32>
      %16 = tpu.matmul %10, %15, %cst_9 {dimension_numbers = #tpu.dot_dimension_numbers<[1], [0], [0], [1], [0, 0, 1, 1], [], []>} : vector<16x128xbf16>, vector<128x128xbf16>, vector<16x128xf32> -> vector<16x128xf32>
      %17 = arith.negf %13 : vector<16x128xf32>
      %18 = math.exp %17 : vector<16x128xf32>
      %cst_10 = arith.constant 1.000000e+00 : f32
      %19 = vector.broadcast %cst_10 : f32 to vector<16x128xf32>
      %20 = arith.addf %19, %18 : vector<16x128xf32>
      %21 = arith.divf %19, %20 : vector<16x128xf32>
      %22 = arith.mulf %13, %21 : vector<16x128xf32>
      %23 = arith.mulf %22, %16 : vector<16x128xf32>
      %24 = arith.truncf %23 : vector<16x128xf32> to vector<16x128xbf16>
      %c0_11 = arith.constant 0 : index
      %c0_12 = arith.constant 0 : index
      %c0_13 = arith.constant 0 : index
      %25 = vector.load %arg7[%c0_11, %c0_12, %c0_13] : memref<1x128x128xbf16, #tpu.memory_space<vmem>>, vector<1x128x128xbf16>
      %26 = vector.shape_cast %25 : vector<1x128x128xbf16> to vector<128x128xbf16>
      %cst_14 = arith.constant dense<0.000000e+00> : vector<16x128xf32>
      %27 = tpu.matmul %24, %26, %cst_14 {dimension_numbers = #tpu.dot_dimension_numbers<[1], [0], [0], [1], [0, 0, 1, 1], [], []>} : vector<16x128xbf16>, vector<128x128xbf16>, vector<16x128xf32> -> vector<16x128xf32>
      %c0_15 = arith.constant 0 : index
      %c0_16 = arith.constant 0 : index
      %28 = vector.load %arg8[%c0_15, %c0_16] : memref<16x128xf32, #tpu.memory_space<vmem>>, vector<16x128xf32>
      %c0_17 = arith.constant 0 : index
      %c0_18 = arith.constant 0 : index
      %c0_19 = arith.constant 0 : index
      %29 = vector.load %arg4[%c0_17, %c0_18, %c0_19] : memref<1x16x1xf32, #tpu.memory_space<vmem>>, vector<1x16x1xf32>
      %30 = vector.shape_cast %29 : vector<1x16x1xf32> to vector<16x1xf32>
      %31 = vector.broadcast %30 : vector<16x1xf32> to vector<16x128xf32>
      %32 = arith.mulf %31, %27 : vector<16x128xf32>
      %33 = arith.addf %28, %32 : vector<16x128xf32>
      %c0_20 = arith.constant 0 : index
      %c0_21 = arith.constant 0 : index
      %34 = vector.load %arg8[%c0_20, %c0_21] : memref<16x128xf32, #tpu.memory_space<vmem>>, vector<16x128xf32>
      tpu.vector_store %arg8[%c0_20, %c0_21], %33 {strides = array<i32>} : memref<16x128xf32, #tpu.memory_space<vmem>>, vector<16x128xf32>,
    } else {
    }
    return
  }
  func.func @transform_0(%arg0: i32, %arg1: i32, %arg2: memref<9xi32, #tpu.memory_space<smem>>) -> (i32, i32) {
    %c0_i32 = arith.constant 0 : i32
    %c0_i32_0 = arith.constant 0 : i32
    return %arg0, %c0_i32 : i32, i32
  }
  func.func @transform_1(%arg0: i32, %arg1: i32, %arg2: memref<9xi32, #tpu.memory_space<smem>>) -> (i32, i32, i32) {
    %c0_i32 = arith.constant 0 : i32
    %c0_i32_0 = arith.constant 0 : i32
    return %arg1, %arg0, %c0_i32 : i32, i32, i32
  }
  func.func @transform_2(%arg0: i32, %arg1: i32, %arg2: memref<9xi32, #tpu.memory_space<smem>>) -> (i32, i32, i32) {
    %c9_i32 = arith.constant 9 : i32
    %0 = arith.muli %arg0, %c9_i32 : i32
    %1 = arith.addi %0, %arg1 : i32
    %2 = arith.index_cast %1 : i32 to index
    %3 = memref.load %arg2[%2] : memref<9xi32, #tpu.memory_space<smem>>
    %c0_i32 = arith.constant 0 : i32
    %c0_i32_0 = arith.constant 0 : i32
    %c0_i32_1 = arith.constant 0 : i32
    return %3, %c0_i32, %c0_i32_0 : i32, i32, i32
  }
  func.func @transform_3(%arg0: i32, %arg1: i32, %arg2: memref<9xi32, #tpu.memory_space<smem>>) -> (i32, i32, i32) {
    %c9_i32 = arith.constant 9 : i32
    %0 = arith.muli %arg0, %c9_i32 : i32
    %1 = arith.addi %0, %arg1 : i32
    %2 = arith.index_cast %1 : i32 to index
    %3 = memref.load %arg2[%2] : memref<9xi32, #tpu.memory_space<smem>>
    %c0_i32 = arith.constant 0 : i32
    %c0_i32_0 = arith.constant 0 : i32
    %c0_i32_1 = arith.constant 0 : i32
    return %3, %c0_i32, %c0_i32_0 : i32, i32, i32
  }
  func.func @transform_4(%arg0: i32, %arg1: i32, %arg2: memref<9xi32, #tpu.memory_space<smem>>) -> (i32, i32, i32) {
    %c9_i32 = arith.constant 9 : i32
    %0 = arith.muli %arg0, %c9_i32 : i32
    %1 = arith.addi %0, %arg1 : i32
    %2 = arith.index_cast %1 : i32 to index
    %3 = memref.load %arg2[%2] : memref<9xi32, #tpu.memory_space<smem>>
    %c0_i32 = arith.constant 0 : i32
    %c0_i32_0 = arith.constant 0 : i32
    %c0_i32_1 = arith.constant 0 : i32
    return %3, %c0_i32, %c0_i32_0 : i32, i32, i32
  }
  func.func @transform_5(%arg0: i32, %arg1: i32, %arg2: memref<9xi32, #tpu.memory_space<smem>>) -> (i32, i32) {
    %c0_i32 = arith.constant 0 : i32
    %c0_i32_0 = arith.constant 0 : i32
    return %arg0, %c0_i32 : i32, i32
  }
}

</mosaic_0001>

<llo_original>
// kernel: moe_feed_forward.1
$region0: #{moe_feed_forward.1}
  #allocation0 [shape = 'u32[]', space=smem, size = 0x4, offset = 0x4, fixed_abs, tag = 'smem constant byte address 0x4 - core index']
  #allocation1 [shape = 'u32[72,128]{1,0:T(1,128)}', space=vmem, size = 0x9000, scoped, tag = 'internal scratch']
  #allocation2 [shape = 's32[1]{0}', space=sflag, size = 0x4, scoped, tag = 'scoped memory for moe_feed_forward.1']
  #allocation3 [shape = 'u8[512]{0}', space=smem, size = 0x200, scoped, tag = 'prefetched SMEM operand 0']
  %s0 = inlined_call_operand.vmem [shape: s32[9], index: 0, kind: input, shape index: {}]
  %s1 = inlined_call_operand.vmem [shape: bf16[16,128], index: 1, kind: input, shape index: {}]
  %s2 = inlined_call_operand.vmem [shape: f32[9,16,1], index: 2, kind: input, shape index: {}]
  %s3 = inlined_call_operand.vmem [shape: bf16[9,128,128], index: 3, kind: input, shape index: {}]
  %s4 = inlined_call_operand.vmem [shape: bf16[9,128,128], index: 4, kind: input, shape index: {}]
  %s5 = inlined_call_operand.vmem [shape: bf16[9,128,128], index: 5, kind: input, shape index: {}]
  %s6 = inlined_call_operand.hbm [shape: f32[16,128], index: 6, kind: output, shape index: {}]
  %s7 = sld [smem:[#allocation0]]
  $region61: #{moe_feed_forward.1} parent=0
    _
  %s9 = ssub.s32 1, %s7
  %s10 = scalar_select 0, %s9, %s7
  %s12 = sshll.u32 %s0, 4
  %s13 = int_to_ptr.vmem [resolvable:$true] %s12
  %15 = dma.vmem_to_smem %s13, 16, [#allocation3], [#allocation2]
  %17 = dma.done [#allocation2], 16
  %18 = sfence
  $region1: #{moe_feed_forward.1} parent=0
    #allocation4 [shape = 'u8[8192]{0}', space=vmem, size = 0x2000, scoped, tag = 'output window, operand 0, single buffered']
    #allocation5 [shape = 's32[2]{0}', space=sflag, size = 0x8, scoped, tag = 'scoped memory for moe_feed_forward.1']
    %19 = vsyncpa [#allocation5], 0
    loop: start=0, step=1, limit=11
    $region2: #{moe_feed_forward.1} parent=1 // loop_pre_header
      _
    $region3: #{moe_feed_forward.1} parent=1 // loop_header
      %s21 = sphi 0, %s25
      %p22 = scmp.ge.s32.totalorder %s21, 11
      %s28 = sphi 0, %s40
      %s29 = sphi 0, %s36
      %s30 = sphi 0, %s28
      %s31 = sphi 0, %s29
      %s32 = sphi 0, %s30
      %s33 = sphi 0, %s31
      %s43 = sphi 0, %s45
      %s46 = sphi 0, %s43
      %s47 = sphi 0, %s46
      %s63 = sphi 0, %s47
      %s71 = sphi 0, %s73
      %s74 = sphi 0, %s71
      %s75 = sphi 0, %s74
      %s91 = sphi 0, %s75
      %s103 = sphi 0, %s105
      %s106 = sphi 0, %s103
      %s107 = sphi 0, %s106
      %s123 = sphi 0, %s107
      %s135 = sphi 0, %s137
      %s138 = sphi 0, %s135
      %s139 = sphi 0, %s138
      %s155 = sphi 0, %s139
      %s167 = sphi 0, %s169
      %s170 = sphi 0, %s167
      %s171 = sphi 0, %s170
      %s187 = sphi 0, %s171
      %s193 = sphi 0, %s195
      %s196 = sphi 0, %s193
      %s197 = sphi 0, %s196
      %s213 = sphi 0, %s197
    $region4: #{moe_feed_forward.1} parent=1 // loop_header_branch
      %24 = sbr.rel (%p22) target = $region8
    $region5: #{moe_feed_forward.1} parent=1 // loop_body
      %s26 = ssub.s32 %s21, 1
      %s27 = ssub.s32 %s21, 2
      %s34 = sadd.s32 1, %s29
      %p35 = scmp.ge.s32.totalorder %s34, 9
      %s36 = scalar_select %p35, 0, %s34
      %s37 = sadd.s32 1, %s28
      %s38 = scalar_select %p35, %s37, %s28
      %p39 = scmp.ge.s32.totalorder %s38, 1
      %s40 = scalar_select %p39, 0, %s38
      %s41 = ssub.s32 %s28, %s40
      %p42 = scmp.eq.s32.totalorder %s41, 0
      %s44 = sadd.s32 %s43, 1
      %s45 = scalar_select %p42, %s43, %s44
      %p48 = pneg %p42
      %p49 = scmp.eq.s32.totalorder %s21, 8
      %p50 = por %p48, %p49
      %p51 = scmp.ne.s32.totalorder %s43, %s46
      %p52 = scmp.eq.s32.totalorder %s21, 0
      %p53 = por %p51, %p52
      %p54 = scmp.ne.s32.totalorder %s43, %s46
      %p55 = scmp.eq.s32.totalorder %s26, 8
      %p56 = por %p54, %p55
      %p57 = scmp.ne.s32.totalorder %s46, %s47
      %p58 = scmp.eq.s32.totalorder %s26, 0
      %p59 = por %p57, %p58
      %p60 = scmp.ne.s32.totalorder %s46, %s47
      %p61 = scmp.eq.s32.totalorder %s27, 8
      %p62 = por %p60, %p61
      %p64 = scmp.ne.s32.totalorder %s47, %s63
      %p65 = scmp.eq.s32.totalorder %s27, 0
      %p66 = por %p64, %p65
      %s67 = ssub.s32 %s29, %s36
      %s68 = ssub.s32 %s28, %s40
      %s69 = sor.u32 %s67, %s68
      %p70 = scmp.eq.s32.totalorder %s69, 0
      %s72 = sadd.s32 %s71, 1
      %s73 = scalar_select %p70, %s71, %s72
      %p76 = pneg %p70
      %p77 = scmp.eq.s32.totalorder %s21, 8
      %p78 = por %p76, %p77
      %p79 = scmp.ne.s32.totalorder %s71, %s74
      %p80 = scmp.eq.s32.totalorder %s21, 0
      %p81 = por %p79, %p80
      %p82 = scmp.ne.s32.totalorder %s71, %s74
      %p83 = scmp.eq.s32.totalorder %s26, 8
      %p84 = por %p82, %p83
      %p85 = scmp.ne.s32.totalorder %s74, %s75
      %p86 = scmp.eq.s32.totalorder %s26, 0
      %p87 = por %p85, %p86
      %p88 = scmp.ne.s32.totalorder %s74, %s75
      %p89 = scmp.eq.s32.totalorder %s27, 8
      %p90 = por %p88, %p89
      %p92 = scmp.ne.s32.totalorder %s75, %s91
      %p93 = scmp.eq.s32.totalorder %s27, 0
      %p94 = por %p92, %p93
      %s95 = smul.u32 %s28, 9
      %s96 = sadd.s32 %s95, %s29
      %s97 = sld [smem:[#allocation3 + %s96]]
      %s98 = smul.u32 %s40, 9
      %s99 = sadd.s32 %s98, %s36
      %s100 = sld [smem:[#allocation3 + %s99]]
      %s101 = ssub.s32 %s97, %s100
      %p102 = scmp.eq.s32.totalorder %s101, 0
      %s104 = sadd.s32 %s103, 1
      %s105 = scalar_select %p102, %s103, %s104
      %p108 = pneg %p102
      %p109 = scmp.eq.s32.totalorder %s21, 8
      %p110 = por %p108, %p109
      %p111 = scmp.ne.s32.totalorder %s103, %s106
      %p112 = scmp.eq.s32.totalorder %s21, 0
      %p113 = por %p111, %p112
      %p114 = scmp.ne.s32.totalorder %s103, %s106
      %p115 = scmp.eq.s32.totalorder %s26, 8
      %p116 = por %p114, %p115
      %p117 = scmp.ne.s32.totalorder %s106, %s107
      %p118 = scmp.eq.s32.totalorder %s26, 0
      %p119 = por %p117, %p118
      %p120 = scmp.ne.s32.totalorder %s106, %s107
      %p121 = scmp.eq.s32.totalorder %s27, 8
      %p122 = por %p120, %p121
      %p124 = scmp.ne.s32.totalorder %s107, %s123
      %p125 = scmp.eq.s32.totalorder %s27, 0
      %p126 = por %p124, %p125
      %s127 = smul.u32 %s28, 9
      %s128 = sadd.s32 %s127, %s29
      %s129 = sld [smem:[#allocation3 + %s128]]
      %s130 = smul.u32 %s40, 9
      %s131 = sadd.s32 %s130, %s36
      %s132 = sld [smem:[#allocation3 + %s131]]
      %s133 = ssub.s32 %s129, %s132
      %p134 = scmp.eq.s32.totalorder %s133, 0
      %s136 = sadd.s32 %s135, 1
      %s137 = scalar_select %p134, %s135, %s136
      %p140 = pneg %p134
      %p141 = scmp.eq.s32.totalorder %s21, 8
      %p142 = por %p140, %p141
      %p143 = scmp.ne.s32.totalorder %s135, %s138
      %p144 = scmp.eq.s32.totalorder %s21, 0
      %p145 = por %p143, %p144
      %p146 = scmp.ne.s32.totalorder %s135, %s138
      %p147 = scmp.eq.s32.totalorder %s26, 8
      %p148 = por %p146, %p147
      %p149 = scmp.ne.s32.totalorder %s138, %s139
      %p150 = scmp.eq.s32.totalorder %s26, 0
      %p151 = por %p149, %p150
      %p152 = scmp.ne.s32.totalorder %s138, %s139
      %p153 = scmp.eq.s32.totalorder %s27, 8
      %p154 = por %p152, %p153
      %p156 = scmp.ne.s32.totalorder %s139, %s155
      %p157 = scmp.eq.s32.totalorder %s27, 0
      %p158 = por %p156, %p157
      %s159 = smul.u32 %s28, 9
      %s160 = sadd.s32 %s159, %s29
      %s161 = sld [smem:[#allocation3 + %s160]]
      %s162 = smul.u32 %s40, 9
      %s163 = sadd.s32 %s162, %s36
      %s164 = sld [smem:[#allocation3 + %s163]]
      %s165 = ssub.s32 %s161, %s164
      %p166 = scmp.eq.s32.totalorder %s165, 0
      %s168 = sadd.s32 %s167, 1
      %s169 = scalar_select %p166, %s167, %s168
      %p172 = pneg %p166
      %p173 = scmp.eq.s32.totalorder %s21, 8
      %p174 = por %p172, %p173
      %p175 = scmp.ne.s32.totalorder %s167, %s170
      %p176 = scmp.eq.s32.totalorder %s21, 0
      %p177 = por %p175, %p176
      %p178 = scmp.ne.s32.totalorder %s167, %s170
      %p179 = scmp.eq.s32.totalorder %s26, 8
      %p180 = por %p178, %p179
      %p181 = scmp.ne.s32.totalorder %s170, %s171
      %p182 = scmp.eq.s32.totalorder %s26, 0
      %p183 = por %p181, %p182
      %p184 = scmp.ne.s32.totalorder %s170, %s171
      %p185 = scmp.eq.s32.totalorder %s27, 8
      %p186 = por %p184, %p185
      %p188 = scmp.ne.s32.totalorder %s171, %s187
      %p189 = scmp.eq.s32.totalorder %s27, 0
      %p190 = por %p188, %p189
      %s191 = ssub.s32 %s28, %s40
      %p192 = scmp.eq.s32.totalorder %s191, 0
      %s194 = sadd.s32 %s193, 1
      %s195 = scalar_select %p192, %s193, %s194
      %p198 = pneg %p192
      %p199 = scmp.eq.s32.totalorder %s21, 8
      %p200 = por %p198, %p199
      %p201 = scmp.ne.s32.totalorder %s193, %s196
      %p202 = scmp.eq.s32.totalorder %s21, 0
      %p203 = por %p201, %p202
      %p204 = scmp.ne.s32.totalorder %s193, %s196
      %p205 = scmp.eq.s32.totalorder %s26, 8
      %p206 = por %p204, %p205
      %p207 = scmp.ne.s32.totalorder %s196, %s197
      %p208 = scmp.eq.s32.totalorder %s26, 0
      %p209 = por %p207, %p208
      %p210 = scmp.ne.s32.totalorder %s196, %s197
      %p211 = scmp.eq.s32.totalorder %s27, 8
      %p212 = por %p210, %p211
      %p214 = scmp.ne.s32.totalorder %s197, %s213
      %p215 = scmp.eq.s32.totalorder %s27, 0
      %p216 = por %p214, %p215
      %p217 = scmp.le.s32.totalorder 1, %s21
      %p218 = scmp.lt.s32.totalorder %s21, 10
      %p219 = pnand %p217, %p218
      %p220 = pneg %p219
      // Predicated region
      $region9: #{moe_feed_forward.1} parent=5 // pred_check
        _
      $region10: #{moe_feed_forward.1} parent=5 // pred_check_branch
        %222 = sbr.rel (%p219) target = $region12
      $region11: #{moe_feed_forward.1} parent=5 // pred_region
        %s223 = ssub.s32 %s21, 1
        // Predicated region
        $region13: #{moe_feed_forward.1} parent=11 // pred_check
          %p224 = pneg %p59
        $region14: #{moe_feed_forward.1} parent=11 // pred_check_branch
          %226 = sbr.rel (%p224) target = $region16
        $region15: #{moe_feed_forward.1} parent=11 // pred_region
          %s227 = smul.u32 2, %s30
          %p228 = scmp.lt.s32.totalorder %s227, 1
          %s229 = scalar_select %p228, %s227, 1
          %s230 = smul.addr %s229, 4
          %s231 = scalar_lea.vmem %s1, %s230
          %s232 = smul.u32 2, %s30
        $region16: #{moe_feed_forward.1} parent=11 // pred_fallthru
          _
      $region12: #{moe_feed_forward.1} parent=5 // pred_fallthru
        _
      %p233 = scmp.lt.s32.totalorder %s21, 9
      // Predicated region
      $region17: #{moe_feed_forward.1} parent=5 // pred_check
        %p234 = pneg %p233
      $region18: #{moe_feed_forward.1} parent=5 // pred_check_branch
        %236 = sbr.rel (%p234) target = $region20
      $region19: #{moe_feed_forward.1} parent=5 // pred_region
        // Predicated region
        $region21: #{moe_feed_forward.1} parent=19 // pred_check
          %p237 = pneg %p81
        $region22: #{moe_feed_forward.1} parent=19 // pred_check_branch
          %239 = sbr.rel (%p237) target = $region24
        $region23: #{moe_feed_forward.1} parent=19 // pred_region
          %s240 = smul.u32 2, %s28
          %p241 = scmp.lt.s32.totalorder %s29, 8
          %s242 = scalar_select %p241, %s29, 8
          %p243 = scmp.lt.s32.totalorder %s240, 1
          %s244 = scalar_select %p243, %s240, 1
          %s245 = smul.addr %s242, 2
          %s246 = sadd.s32 %s244, %s245
          %s247 = smul.addr %s246, 8
          %s248 = scalar_lea.vmem %s2, %s247
          %s249 = smul.u32 2, %s28
        $region24: #{moe_feed_forward.1} parent=19 // pred_fallthru
          _
        // Predicated region
        $region25: #{moe_feed_forward.1} parent=19 // pred_check
          %p250 = pneg %p113
        $region26: #{moe_feed_forward.1} parent=19 // pred_check_branch
          %252 = sbr.rel (%p250) target = $region28
        $region27: #{moe_feed_forward.1} parent=19 // pred_region
          %s253 = smul.u32 %s28, 9
          %s254 = sadd.s32 %s253, %s29
          %s255 = sld [smem:[#allocation3 + %s254]]
          %p256 = scmp.lt.s32.totalorder %s255, 8
          %s257 = scalar_select %p256, %s255, 8
          %s258 = smul.addr %s257, 16
          %s259 = smul.addr %s258, 4
          %s260 = scalar_lea.vmem %s3, %s259
          %s261 = smul.u32 %s28, 9
          %s262 = sadd.s32 %s261, %s29
          %s263 = sld [smem:[#allocation3 + %s262]]
        $region28: #{moe_feed_forward.1} parent=19 // pred_fallthru
          _
        // Predicated region
        $region29: #{moe_feed_forward.1} parent=19 // pred_check
          %p264 = pneg %p145
        $region30: #{moe_feed_forward.1} parent=19 // pred_check_branch
          %266 = sbr.rel (%p264) target = $region32
        $region31: #{moe_feed_forward.1} parent=19 // pred_region
          %s267 = smul.u32 %s28, 9
          %s268 = sadd.s32 %s267, %s29
          %s269 = sld [smem:[#allocation3 + %s268]]
          %p270 = scmp.lt.s32.totalorder %s269, 8
          %s271 = scalar_select %p270, %s269, 8
          %s272 = smul.addr %s271, 16
          %s273 = smul.addr %s272, 4
          %s274 = scalar_lea.vmem %s4, %s273
          %s275 = smul.u32 %s28, 9
          %s276 = sadd.s32 %s275, %s29
          %s277 = sld [smem:[#allocation3 + %s276]]
        $region32: #{moe_feed_forward.1} parent=19 // pred_fallthru
          _
        // Predicated region
        $region33: #{moe_feed_forward.1} parent=19 // pred_check
          %p278 = pneg %p177
        $region34: #{moe_feed_forward.1} parent=19 // pred_check_branch
          %280 = sbr.rel (%p278) target = $region36
        $region35: #{moe_feed_forward.1} parent=19 // pred_region
          %s281 = smul.u32 %s28, 9
          %s282 = sadd.s32 %s281, %s29
          %s283 = sld [smem:[#allocation3 + %s282]]
          %p284 = scmp.lt.s32.totalorder %s283, 8
          %s285 = scalar_select %p284, %s283, 8
          %s286 = smul.addr %s285, 16
          %s287 = smul.addr %s286, 4
          %s288 = scalar_lea.vmem %s5, %s287
          %s289 = smul.u32 %s28, 9
          %s290 = sadd.s32 %s289, %s29
          %s291 = sld [smem:[#allocation3 + %s290]]
        $region36: #{moe_feed_forward.1} parent=19 // pred_fallthru
          _
      $region20: #{moe_feed_forward.1} parent=5 // pred_fallthru
        _
      %p292 = scmp.le.s32.totalorder 1, %s21
      %p293 = scmp.lt.s32.totalorder %s21, 10
      %p294 = pnand %p292, %p293
      %p295 = pneg %p294
      // Predicated region
      $region37: #{moe_feed_forward.1} parent=5 // pred_check
        _
      $region38: #{moe_feed_forward.1} parent=5 // pred_check_branch
        %297 = sbr.rel (%p294) target = $region40
      $region39: #{moe_feed_forward.1} parent=5 // pred_region
        %s298 = ssub.s32 %s21, 1
        %s299 = smul.u32 2, %s30
        %p300 = scmp.lt.s32.totalorder %s299, 1
        %s301 = scalar_select %p300, %s299, 1
        %s302 = smul.addr %s301, 4
        %s303 = scalar_lea.vmem %s1, %s302
        %p304 = pneg %p59
        %p305 = pneg %p56
        %s306 = smul.u32 2, %s30
        %p307 = scmp.lt.s32.totalorder %s31, 8
        %s308 = scalar_select %p307, %s31, 8
        %p309 = scmp.lt.s32.totalorder %s306, 1
        %s310 = scalar_select %p309, %s306, 1
        %s311 = smul.addr %s308, 2
        %s312 = sadd.s32 %s310, %s311
        %s313 = smul.addr %s312, 8
        %s314 = scalar_lea.vmem %s2, %s313
        %p315 = pneg %p87
        %p316 = pneg %p84
        %s317 = smul.u32 %s30, 9
        %s318 = sadd.s32 %s317, %s31
        %s319 = sld [smem:[#allocation3 + %s318]]
        %p320 = scmp.lt.s32.totalorder %s319, 8
        %s321 = scalar_select %p320, %s319, 8
        %s322 = smul.addr %s321, 16
        %s323 = smul.addr %s322, 4
        %s324 = scalar_lea.vmem %s3, %s323
        %p325 = pneg %p119
        %p326 = pneg %p116
        %s327 = smul.u32 %s30, 9
        %s328 = sadd.s32 %s327, %s31
        %s329 = sld [smem:[#allocation3 + %s328]]
        %p330 = scmp.lt.s32.totalorder %s329, 8
        %s331 = scalar_select %p330, %s329, 8
        %s332 = smul.addr %s331, 16
        %s333 = smul.addr %s332, 4
        %s334 = scalar_lea.vmem %s4, %s333
        %p335 = pneg %p151
        %p336 = pneg %p148
        %s337 = smul.u32 %s30, 9
        %s338 = sadd.s32 %s337, %s31
        %s339 = sld [smem:[#allocation3 + %s338]]
        %p340 = scmp.lt.s32.totalorder %s339, 8
        %s341 = scalar_select %p340, %s339, 8
        %s342 = smul.addr %s341, 16
        %s343 = smul.addr %s342, 4
        %s344 = scalar_lea.vmem %s5, %s343
        %p345 = pneg %p183
        %p346 = pneg %p180
        %p347 = pneg %p209
        %p348 = pneg %p206
        %s349 = smul.u32 2, %s30
        %p350 = scmp.lt.s32.totalorder %s349, 1
        %s351 = scalar_select %p350, %s349, 1
        %s352 = smul.addr %s351, 4
        %s353 = scalar_lea.vmem %s1, %s352
        %s354 = smul.u32 2, %s30
        %s355 = smul.u32 2, %s30
        %p356 = scmp.lt.s32.totalorder %s31, 8
        %s357 = scalar_select %p356, %s31, 8
        %p358 = scmp.lt.s32.totalorder %s355, 1
        %s359 = scalar_select %p358, %s355, 1
        %s360 = smul.addr %s357, 2
        %s361 = sadd.s32 %s359, %s360
        %s362 = smul.addr %s361, 8
        %s363 = scalar_lea.vmem %s2, %s362
        %s364 = smul.u32 2, %s30
        %s365 = smul.u32 %s30, 9
        %s366 = sadd.s32 %s365, %s31
        %s367 = sld [smem:[#allocation3 + %s366]]
        %p368 = scmp.lt.s32.totalorder %s367, 8
        %s369 = scalar_select %p368, %s367, 8
        %s370 = smul.addr %s369, 16
        %s371 = smul.addr %s370, 4
        %s372 = scalar_lea.vmem %s3, %s371
        %s373 = smul.u32 %s30, 9
        %s374 = sadd.s32 %s373, %s31
        %s375 = sld [smem:[#allocation3 + %s374]]
        %s376 = smul.u32 %s30, 9
        %s377 = sadd.s32 %s376, %s31
        %s378 = sld [smem:[#allocation3 + %s377]]
        %p379 = scmp.lt.s32.totalorder %s378, 8
        %s380 = scalar_select %p379, %s378, 8
        %s381 = smul.addr %s380, 16
        %s382 = smul.addr %s381, 4
        %s383 = scalar_lea.vmem %s4, %s382
        %s384 = smul.u32 %s30, 9
        %s385 = sadd.s32 %s384, %s31
        %s386 = sld [smem:[#allocation3 + %s385]]
        %s387 = smul.u32 %s30, 9
        %s388 = sadd.s32 %s387, %s31
        %s389 = sld [smem:[#allocation3 + %s388]]
        %p390 = scmp.lt.s32.totalorder %s389, 8
        %s391 = scalar_select %p390, %s389, 8
        %s392 = smul.addr %s391, 16
        %s393 = smul.addr %s392, 4
        %s394 = scalar_lea.vmem %s5, %s393
        %s395 = smul.u32 %s30, 9
        %s396 = sadd.s32 %s395, %s31
        %s397 = sld [smem:[#allocation3 + %s396]]
        %s398 = smul.u32 2, %s30
        %p399 = scmp.eq.s32.totalorder %s31, 0
        // Predicated region
        $region41: #{moe_feed_forward.1} parent=39 // pred_check
          %p400 = pneg %p399
        $region42: #{moe_feed_forward.1} parent=39 // pred_check_branch
          %402 = sbr.rel (%p400) target = $region44
        $region43: #{moe_feed_forward.1} parent=39 // pred_region
          %403 = vst [vmem:[#allocation4] sm:$0xff] 0.0
          %404 = vst [vmem:[#allocation4 + $0x8] sm:$0xff] 0.0
        $region44: #{moe_feed_forward.1} parent=39 // pred_fallthru
          _
        %s405 = smul.u32 %s30, 9
        %s406 = sadd.s32 %s405, %s31
        %s407 = sld [smem:[#allocation3 + %s406]]
        %p408 = scmp.eq.s32.totalorder %s407, %s31
        // Predicated region
        $region45: #{moe_feed_forward.1} parent=39 // pred_check
          %p409 = pneg %p408
        $region46: #{moe_feed_forward.1} parent=39 // pred_check_branch
          %411 = sbr.rel (%p409) target = $region48
        $region47: #{moe_feed_forward.1} parent=39 // pred_region
          %v412 = vld [vmem:[%s353] sm:$0xf]
          %v413 = vld [vmem:[%s353 + $0x4] sm:$0xf]
          %v414 = vld [vmem:[%s372] sm:$0xf]
          %v415 = vld [vmem:[%s372 + $0x4] sm:$0xf]
          %v416 = vld [vmem:[%s372 + $0x8] sm:$0xf]
          %v417 = vld [vmem:[%s372 + $0xc] sm:$0xf]
          %v418 = vld [vmem:[%s372 + $0x10] sm:$0xf]
          %v419 = vld [vmem:[%s372 + $0x14] sm:$0xf]
          %v420 = vld [vmem:[%s372 + $0x18] sm:$0xf]
          %v421 = vld [vmem:[%s372 + $0x1c] sm:$0xf]
          %v422 = vld [vmem:[%s372 + $0x20] sm:$0xf]
          %v423 = vld [vmem:[%s372 + $0x24] sm:$0xf]
          %v424 = vld [vmem:[%s372 + $0x28] sm:$0xf]
          %v425 = vld [vmem:[%s372 + $0x2c] sm:$0xf]
          %v426 = vld [vmem:[%s372 + $0x30] sm:$0xf]
          %v427 = vld [vmem:[%s372 + $0x34] sm:$0xf]
          %v428 = vld [vmem:[%s372 + $0x38] sm:$0xf]
          %v429 = vld [vmem:[%s372 + $0x3c] sm:$0xf]
          %v432 = vunpack.c.l.b16 %v412
          %v433 = vunpack.c.l.b16 %v413
          %v434 = vpack.c.b16 %v433, %v432
          %v452 = vunpack.c.l.b16 %v414
          %v453 = vunpack.c.l.b16 %v415
          %v454 = vunpack.c.l.b16 %v416
          %v455 = vunpack.c.l.b16 %v417
          %v456 = vunpack.c.l.b16 %v418
          %v457 = vunpack.c.l.b16 %v419
          %v458 = vunpack.c.l.b16 %v420
          %v459 = vunpack.c.l.b16 %v421
          %v460 = vunpack.c.l.b16 %v422
          %v461 = vunpack.c.l.b16 %v423
          %v462 = vunpack.c.l.b16 %v424
          %v463 = vunpack.c.l.b16 %v425
          %v464 = vunpack.c.l.b16 %v426
          %v465 = vunpack.c.l.b16 %v427
          %v466 = vunpack.c.l.b16 %v428
          %v467 = vunpack.c.l.b16 %v429
          %v468 = vpack.c.b16 %v453, %v452
          %v469 = vpack.c.b16 %v455, %v454
          %v470 = vpack.c.b16 %v457, %v456
          %v471 = vpack.c.b16 %v459, %v458
          %v472 = vpack.c.b16 %v461, %v460
          %v473 = vpack.c.b16 %v463, %v462
          %v474 = vpack.c.b16 %v465, %v464
          %v475 = vpack.c.b16 %v467, %v466
          %484 = vmatpush.bf16.msra.mxu0 %v475
          %485 = vmatpush.bf16.msra.mxu0 %v474
          %486 = vmatpush.bf16.msra.mxu0 %v473
          %487 = vmatpush.bf16.msra.mxu0 %v472
          %488 = vmatpush.bf16.msra.mxu0 %v471
          %489 = vmatpush.bf16.msra.mxu0 %v470
          %490 = vmatpush.bf16.msra.mxu0 %v469
          %491 = vmatpush.bf16.msra.mxu0 %v468
          %492 = vmatmul.bf16.gmra.mxu0 %v434
          %v493 = vpop.f32.mrf.mxu0
          %v494 = vadd.f32 0.0, %v493
          %v495 = vpop.f32.mrf.mxu0
          %v496 = vadd.f32 0.0, %v495
          %497 = vdwg.mxu0
          %v498 = vld [vmem:[%s383] sm:$0xf]
          %v499 = vld [vmem:[%s383 + $0x4] sm:$0xf]
          %v500 = vld [vmem:[%s383 + $0x8] sm:$0xf]
          %v501 = vld [vmem:[%s383 + $0xc] sm:$0xf]
          %v502 = vld [vmem:[%s383 + $0x10] sm:$0xf]
          %v503 = vld [vmem:[%s383 + $0x14] sm:$0xf]
          %v504 = vld [vmem:[%s383 + $0x18] sm:$0xf]
          %v505 = vld [vmem:[%s383 + $0x1c] sm:$0xf]
          %v506 = vld [vmem:[%s383 + $0x20] sm:$0xf]
          %v507 = vld [vmem:[%s383 + $0x24] sm:$0xf]
          %v508 = vld [vmem:[%s383 + $0x28] sm:$0xf]
          %v509 = vld [vmem:[%s383 + $0x2c] sm:$0xf]
          %v510 = vld [vmem:[%s383 + $0x30] sm:$0xf]
          %v511 = vld [vmem:[%s383 + $0x34] sm:$0xf]
          %v512 = vld [vmem:[%s383 + $0x38] sm:$0xf]
          %v513 = vld [vmem:[%s383 + $0x3c] sm:$0xf]
          %v530 = vunpack.c.l.b16 %v498
          %v531 = vunpack.c.l.b16 %v499
          %v532 = vunpack.c.l.b16 %v500
          %v533 = vunpack.c.l.b16 %v501
          %v534 = vunpack.c.l.b16 %v502
          %v535 = vunpack.c.l.b16 %v503
          %v536 = vunpack.c.l.b16 %v504
          %v537 = vunpack.c.l.b16 %v505
          %v538 = vunpack.c.l.b16 %v506
          %v539 = vunpack.c.l.b16 %v507
          %v540 = vunpack.c.l.b16 %v508
          %v541 = vunpack.c.l.b16 %v509
          %v542 = vunpack.c.l.b16 %v510
          %v543 = vunpack.c.l.b16 %v511
          %v544 = vunpack.c.l.b16 %v512
          %v545 = vunpack.c.l.b16 %v513
          %v546 = vpack.c.b16 %v531, %v530
          %v547 = vpack.c.b16 %v533, %v532
          %v548 = vpack.c.b16 %v535, %v534
          %v549 = vpack.c.b16 %v537, %v536
          %v550 = vpack.c.b16 %v539, %v538
          %v551 = vpack.c.b16 %v541, %v540
          %v552 = vpack.c.b16 %v543, %v542
          %v553 = vpack.c.b16 %v545, %v544
          %562 = vmatpush.bf16.msra.mxu0 %v553
          %563 = vmatpush.bf16.msra.mxu0 %v552
          %564 = vmatpush.bf16.msra.mxu0 %v551
          %565 = vmatpush.bf16.msra.mxu0 %v550
          %566 = vmatpush.bf16.msra.mxu0 %v549
          %567 = vmatpush.bf16.msra.mxu0 %v548
          %568 = vmatpush.bf16.msra.mxu0 %v547
          %569 = vmatpush.bf16.msra.mxu0 %v546
          %570 = vmatmul.bf16.gmra.mxu0 %v434
          %v571 = vpop.f32.mrf.mxu0
          %v572 = vadd.f32 0.0, %v571
          %v573 = vpop.f32.mrf.mxu0
          %v574 = vadd.f32 0.0, %v573
          %575 = vdwg.mxu0
          %v576 = vxor.u32 %v494, 2147483648
          %v577 = vxor.u32 %v496, 2147483648
          %v578 = vmul.f32 %v576, 1.442695
          %v579 = vpow.pop %v578
          %v580 = vmul.f32 %v577, 1.442695
          %v581 = vpow.pop %v580
          %v582 = vadd.f32 %v579, 1.0
          %v583 = vadd.f32 %v581, 1.0
          %v584 = vrcp.pop %v582
          %v585 = vmul.f32 %v582, %v584
          %v586 = vsub.f32 1.0, %v585
          %v587 = vmul.f32 %v584, %v586
          %v588 = vadd.f32 %v584, %v587
          %vm589 = vweird.f32 %v582
          %vm590 = vweird.f32 %v584
          %vm591 = vmor %vm589, %vm590
          %v592 = vsel %vm591, %v584, %v588
          %v593 = vand.u32 2147483647, %v582
          %vm594 = vcmp.eq.f32.partialorder %v593, 8.507059e+37
          %v595 = vand.u32 %v582, 2147483648
          %v596 = vor.u32 1.1754944e-38, %v595
          %v597 = vsel %vm594, %v596, %v592
          %v598 = vmul.f32 1.0, %v597
          %v599 = vrcp.pop %v583
          %v600 = vmul.f32 %v583, %v599
          %v601 = vsub.f32 1.0, %v600
          %v602 = vmul.f32 %v599, %v601
          %v603 = vadd.f32 %v599, %v602
          %vm604 = vweird.f32 %v583
          %vm605 = vweird.f32 %v599
          %vm606 = vmor %vm604, %vm605
          %v607 = vsel %vm606, %v599, %v603
          %v608 = vand.u32 2147483647, %v583
          %vm609 = vcmp.eq.f32.partialorder %v608, 8.507059e+37
          %v610 = vand.u32 %v583, 2147483648
          %v611 = vor.u32 1.1754944e-38, %v610
          %v612 = vsel %vm609, %v611, %v607
          %v613 = vmul.f32 1.0, %v612
          %v614 = vmul.f32 %v494, %v598
          %v615 = vmul.f32 %v496, %v613
          %v616 = vmul.f32 %v614, %v572
          %v617 = vmul.f32 %v615, %v574
          %v618 = vpack.c.bf16 %v617, %v616
          %v619 = vld [vmem:[%s394] sm:$0xf]
          %v620 = vld [vmem:[%s394 + $0x4] sm:$0xf]
          %v621 = vld [vmem:[%s394 + $0x8] sm:$0xf]
          %v622 = vld [vmem:[%s394 + $0xc] sm:$0xf]
          %v623 = vld [vmem:[%s394 + $0x10] sm:$0xf]
          %v624 = vld [vmem:[%s394 + $0x14] sm:$0xf]
          %v625 = vld [vmem:[%s394 + $0x18] sm:$0xf]
          %v626 = vld [vmem:[%s394 + $0x1c] sm:$0xf]
          %v627 = vld [vmem:[%s394 + $0x20] sm:$0xf]
          %v628 = vld [vmem:[%s394 + $0x24] sm:$0xf]
          %v629 = vld [vmem:[%s394 + $0x28] sm:$0xf]
          %v630 = vld [vmem:[%s394 + $0x2c] sm:$0xf]
          %v631 = vld [vmem:[%s394 + $0x30] sm:$0xf]
          %v632 = vld [vmem:[%s394 + $0x34] sm:$0xf]
          %v633 = vld [vmem:[%s394 + $0x38] sm:$0xf]
          %v634 = vld [vmem:[%s394 + $0x3c] sm:$0xf]
          %v651 = vunpack.c.l.b16 %v619
          %v652 = vunpack.c.l.b16 %v620
          %v653 = vunpack.c.l.b16 %v621
          %v654 = vunpack.c.l.b16 %v622
          %v655 = vunpack.c.l.b16 %v623
          %v656 = vunpack.c.l.b16 %v624
          %v657 = vunpack.c.l.b16 %v625
          %v658 = vunpack.c.l.b16 %v626
          %v659 = vunpack.c.l.b16 %v627
          %v660 = vunpack.c.l.b16 %v628
          %v661 = vunpack.c.l.b16 %v629
          %v662 = vunpack.c.l.b16 %v630
          %v663 = vunpack.c.l.b16 %v631
          %v664 = vunpack.c.l.b16 %v632
          %v665 = vunpack.c.l.b16 %v633
          %v666 = vunpack.c.l.b16 %v634
          %v667 = vpack.c.b16 %v652, %v651
          %v668 = vpack.c.b16 %v654, %v653
          %v669 = vpack.c.b16 %v656, %v655
          %v670 = vpack.c.b16 %v658, %v657
          %v671 = vpack.c.b16 %v660, %v659
          %v672 = vpack.c.b16 %v662, %v661
          %v673 = vpack.c.b16 %v664, %v663
          %v674 = vpack.c.b16 %v666, %v665
          %683 = vmatpush.bf16.msra.mxu0 %v674
          %684 = vmatpush.bf16.msra.mxu0 %v673
          %685 = vmatpush.bf16.msra.mxu0 %v672
          %686 = vmatpush.bf16.msra.mxu0 %v671
          %687 = vmatpush.bf16.msra.mxu0 %v670
          %688 = vmatpush.bf16.msra.mxu0 %v669
          %689 = vmatpush.bf16.msra.mxu0 %v668
          %690 = vmatpush.bf16.msra.mxu0 %v667
          %691 = vmatmul.bf16.gmra.mxu0 %v618
          %v692 = vpop.f32.mrf.mxu0
          %v693 = vadd.f32 0.0, %v692
          %v694 = vpop.f32.mrf.mxu0
          %v695 = vadd.f32 0.0, %v694
          %696 = vdwg.mxu0
          %v697 = vld [vmem:[#allocation4] sm:$0xff]
          %v698 = vld [vmem:[#allocation4 + $0x8] sm:$0xff]
          %v699 = vld [vmem:[%s363] sm:$0xff]
          %v700 = vld [vmem:[%s363 + $0x8] sm:$0xff]
          %702 = vset.pattern.permute.xlu0 0
          %703 = vperm.xlu0 %702, %v699
          %v704 = vpop.permute.xlu0 %703
          %707 = vset.pattern.permute.xlu0 0
          %708 = vperm.xlu0 %707, %v700
          %v709 = vpop.permute.xlu0 %708
          %v711 = vmul.f32 %v704, %v693
          %v712 = vmul.f32 %v709, %v695
          %v713 = vadd.f32 %v697, %v711
          %v714 = vadd.f32 %v698, %v712
          %715 = vst [vmem:[#allocation4] sm:$0xff] %v713
          %716 = vst [vmem:[#allocation4 + $0x8] sm:$0xff] %v714
        $region48: #{moe_feed_forward.1} parent=39 // pred_fallthru
          _
        // Predicated region
        $region49: #{moe_feed_forward.1} parent=39 // pred_check
          %p717 = pneg %p206
        $region50: #{moe_feed_forward.1} parent=39 // pred_check_branch
          %719 = sbr.rel (%p717) target = $region52
        $region51: #{moe_feed_forward.1} parent=39 // pred_region
          %s720 = smul.u32 2, %s30
          %722 = vsyncadd [#allocation5], 0
          %s723 = smul.addr %s720, 8
          %s724 = scalar_lea.hbm %s6, %s723
          %s725 = sshll.u32 [#allocation4], 4
          %s726 = int_to_ptr.vmem [resolvable:$true] %s725
          %s727 = sshll.u32 %s724, 4
          %s728 = int_to_ptr.hbm [resolvable:$true] %s727
          %733 = dma.vmem_to_hbm [thread:$0]  %s726, 256, %s728, [#allocation5], 128, 128, 8
        $region52: #{moe_feed_forward.1} parent=39 // pred_fallthru
          _
        // Predicated region
        $region53: #{moe_feed_forward.1} parent=39 // pred_check
          %p734 = pneg %p206
        $region54: #{moe_feed_forward.1} parent=39 // pred_check_branch
          %736 = sbr.rel (%p734) target = $region56
        $region55: #{moe_feed_forward.1} parent=39 // pred_region
          %738 = dma.done [#allocation5], 256
        $region56: #{moe_feed_forward.1} parent=39 // pred_fallthru
          _
      $region40: #{moe_feed_forward.1} parent=5 // pred_fallthru
        _
      %p739 = scmp.le.s32.totalorder 2, %s21
      // Predicated region
      $region57: #{moe_feed_forward.1} parent=5 // pred_check
        %p740 = pneg %p739
      $region58: #{moe_feed_forward.1} parent=5 // pred_check_branch
        %742 = sbr.rel (%p740) target = $region60
      $region59: #{moe_feed_forward.1} parent=5 // pred_region
        %s743 = ssub.s32 %s21, 2
      $region60: #{moe_feed_forward.1} parent=5 // pred_fallthru
        _
    $region6: #{moe_feed_forward.1} parent=1 // loop_footer
      %s25 = sadd.s32 1, %s21
    $region7: #{moe_feed_forward.1} parent=1 // loop_footer_branch
      %20 = sbr.rel target = $region3
    $region8: #{moe_feed_forward.1} parent=1 // loop_exit
      _
    %744 = vsyncpa [#allocation5], 1
    %s745 = scalar_lea.sflag [#allocation5], 1
    %746 = vsyncpa %s745, 1

</llo_original>
